<compile_context>
chip_gen: v7x
topology: tpu7x:2x2x1
jax: 0.10.0
libtpu: 0.0.40
codegen_flags: <defaults>
</compile_context>

<pallas_src>
import functools

import jax
import jax.numpy as jnp
from jax.experimental import pallas as pl
from jax.experimental.pallas import tpu as pltpu


def _round_up(x, m):
    return ((x + m - 1) // m) * m


# ----------------------------------------------------------------------------
# Fused residual-block kernels (one call = one whole block on one M-tile).
# All matmuls accumulate in f32 on the MXU; elementwise math stays f32 and is
# only cast at the output store.
# ----------------------------------------------------------------------------
def _res_block_kernel_ds(x_ref, w1_ref, b1_ref, w2_ref, b2_ref, wd_ref, bd_ref,
                         o_ref):
    x = x_ref[...]
    # downsample path: conv1x1 + folded-BN affine (scale already folded in wd)
    identity = (jnp.dot(x, wd_ref[...], preferred_element_type=jnp.float32)
                + bd_ref[...])
    # main path: conv1 + BN1 + ReLU
    y1 = (jnp.dot(x, w1_ref[...], preferred_element_type=jnp.float32)
          + b1_ref[...])
    y1 = jnp.maximum(y1, 0.0)
    # conv2 + BN2 + residual + ReLU
    y2 = (jnp.dot(y1.astype(w2_ref.dtype), w2_ref[...],
                  preferred_element_type=jnp.float32) + b2_ref[...])
    o_ref[...] = jnp.maximum(y2 + identity, 0.0).astype(o_ref.dtype)


def _res_block_kernel_id(x_ref, w1_ref, b1_ref, w2_ref, b2_ref, o_ref):
    x = x_ref[...]
    y1 = (jnp.dot(x, w1_ref[...], preferred_element_type=jnp.float32)
          + b1_ref[...])
    y1 = jnp.maximum(y1, 0.0)
    y2 = (jnp.dot(y1.astype(w2_ref.dtype), w2_ref[...],
                  preferred_element_type=jnp.float32) + b2_ref[...])
    o_ref[...] = jnp.maximum(y2 + x.astype(jnp.float32), 0.0).astype(o_ref.dtype)


def fused_res_block(x2d, params, *, tm=512, out_dtype=None):
    """Whole residual block on a flattened (M, Cin) activation matrix.

    x2d:     (M, Cin)     activations (channels on the lane axis)
    params:  dict with w1 (Cin,Cout), b1 (1,Cout), w2 (Cout,Cout), b2 (1,Cout)
             and optionally wd (Cin,Cout), bd (1,Cout) for the downsample path.
    """
    M, cin = x2d.shape
    cout = params["w1"].shape[1]
    out_dtype = out_dtype or x2d.dtype

    # M-tile: big enough for ~HBM roofline, multiple of 8 sublanes.
    TM = min(tm, _round_up(M, 8))
    grid = (pl.cdiv(M, TM),)

    act_spec = lambda c: pl.BlockSpec((TM, c), lambda i: (i, 0))
    fixed = lambda shape: pl.BlockSpec(shape, lambda i: (0, 0))  # VMEM-resident

    has_ds = "wd" in params
    if has_ds:
        kernel = _res_block_kernel_ds
        args = (x2d, params["w1"], params["b1"], params["w2"], params["b2"],
                params["wd"], params["bd"])
        in_specs = [act_spec(cin),
                    fixed((cin, cout)), fixed((1, cout)),
                    fixed((cout, cout)), fixed((1, cout)),
                    fixed((cin, cout)), fixed((1, cout))]
        flops = 2 * M * (2 * cin * cout + cout * cout)
        w_bytes = (2 * cin * cout + cout * cout + 3 * cout) * 4
    else:
        kernel = _res_block_kernel_id
        args = (x2d, params["w1"], params["b1"], params["w2"], params["b2"])
        in_specs = [act_spec(cin),
                    fixed((cin, cout)), fixed((1, cout)),
                    fixed((cout, cout)), fixed((1, cout))]
        flops = 2 * M * (cin * cout + cout * cout)
        w_bytes = (cin * cout + cout * cout + 2 * cout) * 4

    bytes_accessed = (M * cin * x2d.dtype.itemsize
                      + M * cout * jnp.dtype(out_dtype).itemsize
                      + w_bytes)

    return pl.pallas_call(
        kernel,
        out_shape=jax.ShapeDtypeStruct((M, cout), out_dtype),
        grid=grid,
        in_specs=in_specs,
        out_specs=act_spec(cout),
        compiler_params=pltpu.CompilerParams(
            dimension_semantics=("parallel",),   # shard M-tiles across TCs (v7x)
            vmem_limit_bytes=32 * 1024 * 1024),
        cost_estimate=pl.CostEstimate(flops=flops, transcendentals=0,
                                      bytes_accessed=bytes_accessed),
    )(*args)


# ----------------------------------------------------------------------------
# Parameter init (deterministic, synthetic); BN scale folded into conv weights.
# ----------------------------------------------------------------------------
def _init_conv1x1(key, cin, cout):
    # PyTorch weight is (cout, cin, 1, 1); stored as the (cin, cout) matmul form.
    return 0.1 * jax.random.normal(key, (cin, cout), jnp.float32)


def _init_bn_folded(key, c, eps=1e-5):
    k1, k2, k3, k4 = jax.random.split(key, 4)
    gamma = 1.0 + 0.1 * jax.random.normal(k1, (c,), jnp.float32)
    beta = 0.1 * jax.random.normal(k2, (c,), jnp.float32)
    running_mean = 0.1 * jax.random.normal(k3, (c,), jnp.float32)
    running_var = 0.5 + jnp.abs(jax.random.normal(k4, (c,), jnp.float32))
    scale = gamma / jnp.sqrt(running_var + eps)
    bias = beta - running_mean * scale
    return scale, bias


def init_block_params(key, cin, cout, has_downsample):
    ks = jax.random.split(key, 6)
    w1 = _init_conv1x1(ks[0], cin, cout)
    s1, b1 = _init_bn_folded(ks[1], cout)
    w2 = _init_conv1x1(ks[2], cout, cout)
    s2, b2 = _init_bn_folded(ks[3], cout)
    p = {
        "w1": w1 * s1[None, :],          # BN1 scale folded into conv1 weights
        "b1": b1.reshape(1, cout),
        "w2": w2 * s2[None, :],          # BN2 scale folded into conv2 weights
        "b2": b2.reshape(1, cout),
    }
    if has_downsample:
        wd = _init_conv1x1(ks[4], cin, cout)
        sd, bd = _init_bn_folded(ks[5], cout)
        p["wd"] = wd * sd[None, :]       # BNd scale folded into downsample conv
        p["bd"] = bd.reshape(1, cout)
    return p


def init_reslayer_params(key, inp, outp, blocks, stride):
    keys = jax.random.split(key, blocks)
    has_ds = (stride != 1) or (inp != outp)
    params = [init_block_params(keys[0], inp, outp, has_ds)]
    for b in range(1, blocks):
        params.append(init_block_params(keys[b], outp, outp, False))
    return params


# ----------------------------------------------------------------------------
# Forward (layout glue in plain JAX, all block compute in one Pallas call each)
# ----------------------------------------------------------------------------
def res_block_forward(x_nhwc, params):
    """x_nhwc already carries the block's stride (subsampled upstream)."""
    n, h, w, cin = x_nhwc.shape
    cout = params["w1"].shape[1]
    if "wd" not in params:
        # identity residual path requires matching channels (and stride==1,
        # which is guaranteed because the stride is folded upstream).
        assert cin == cout, "identity residual path requires cin == cout"
    y = fused_res_block(x_nhwc.reshape(n * h * w, cin), params)
    return y.reshape(n, h, w, cout)


def reslayer_forward(x_nchw, params, stride):
    # Fold the first block's stride-s subsample into the single NCHW->NHWC
    # layout pass (XLA fuses slice+transpose into one copy): the 1x1 conv with
    # stride s is exactly a 1x1 conv on the subsampled input.
    if stride != 1:
        x_nchw = x_nchw[:, :, ::stride, ::stride]
    x = jnp.transpose(x_nchw, (0, 2, 3, 1))          # NCHW -> NHWC
    for p in params:
        x = res_block_forward(x, p)
    return jnp.transpose(x, (0, 3, 1, 2))            # NHWC -> NCHW


if __name__ == "__main__":
    key = jax.random.PRNGKey(0)
    kx, kp = jax.random.split(key)

    # Small shapes consistent with the module's forward.
    batch, inp, outp = 2, 4, 8
    H = W = 16
    stride = 2
    blocks = 2  # TODO(synk): `blocks` undefined in source; assume 2.

    x = jax.random.normal(kx, (batch, inp, H, W), jnp.float32)  # NCHW
    params = init_reslayer_params(kp, inp, outp, blocks, stride)

    fwd = jax.jit(functools.partial(reslayer_forward, stride=stride))
    out = jax.block_until_ready(fwd(x, params))

    assert out.shape == (batch, outp, H // stride, W // stride), out.shape
    assert out.dtype == x.dtype, out.dtype
    assert bool(jnp.all(jnp.isfinite(out)))
    print("KERNEL_OK")
</pallas_src>

<mosaic_0001>
module attributes {stable_mosaic.version = 11 : i64} {
  func.func @_res_block_kernel_ds(%arg0: i32, %arg1: memref<128x4xf32, #tpu.memory_space<vmem>>, %arg2: memref<4x8xf32, #tpu.memory_space<vmem>>, %arg3: memref<1x8xf32, #tpu.memory_space<vmem>>, %arg4: memref<8x8xf32, #tpu.memory_space<vmem>>, %arg5: memref<1x8xf32, #tpu.memory_space<vmem>>, %arg6: memref<4x8xf32, #tpu.memory_space<vmem>>, %arg7: memref<1x8xf32, #tpu.memory_space<vmem>>, %arg8: memref<128x8xf32, #tpu.memory_space<vmem>>) attributes {dimension_semantics = [#tpu.dimension_semantics<parallel>], iteration_bounds = array<i64: 1>, scalar_prefetch = 0 : i64, scratch_operands = 0 : i64, tpu.core_type = #tpu.core_type<tc>, window_params = [{transform_indices = @transform_0, window_bounds = array<i64: 128, 4>}, {pipeline_mode = #tpu.pipeline_mode<synchronous>, transform_indices = @transform_1, window_bounds = array<i64: 4, 8>}, {pipeline_mode = #tpu.pipeline_mode<synchronous>, transform_indices = @transform_2, window_bounds = array<i64: 1, 8>}, {pipeline_mode = #tpu.pipeline_mode<synchronous>, transform_indices = @transform_3, window_bounds = array<i64: 8, 8>}, {pipeline_mode = #tpu.pipeline_mode<synchronous>, transform_indices = @transform_4, window_bounds = array<i64: 1, 8>}, {pipeline_mode = #tpu.pipeline_mode<synchronous>, transform_indices = @transform_5, window_bounds = array<i64: 4, 8>}, {pipeline_mode = #tpu.pipeline_mode<synchronous>, transform_indices = @transform_6, window_bounds = array<i64: 1, 8>}, {transform_indices = @transform_7, window_bounds = array<i64: 128, 8>}]} {
    %c0 = arith.constant 0 : index
    %c0_0 = arith.constant 0 : index
    %0 = vector.load %arg1[%c0, %c0_0] : memref<128x4xf32, #tpu.memory_space<vmem>>, vector<128x4xf32>
    %c0_1 = arith.constant 0 : index
    %c0_2 = arith.constant 0 : index
    %1 = vector.load %arg6[%c0_1, %c0_2] : memref<4x8xf32, #tpu.memory_space<vmem>>, vector<4x8xf32>
    %cst = arith.constant dense<0.000000e+00> : vector<128x8xf32>
    %2 = tpu.matmul %0, %1, %cst {dimension_numbers = #tpu.dot_dimension_numbers<[1], [0], [0], [1], [0, 0, 1, 1], [], []>} : vector<128x4xf32>, vector<4x8xf32>, vector<128x8xf32> -> vector<128x8xf32>
    %c0_3 = arith.constant 0 : index
    %c0_4 = arith.constant 0 : index
    %3 = vector.load %arg7[%c0_3, %c0_4] : memref<1x8xf32, #tpu.memory_space<vmem>>, vector<1x8xf32>
    %4 = vector.broadcast %3 : vector<1x8xf32> to vector<128x8xf32>
    %5 = arith.addf %2, %4 : vector<128x8xf32>
    %c0_5 = arith.constant 0 : index
    %c0_6 = arith.constant 0 : index
    %6 = vector.load %arg2[%c0_5, %c0_6] : memref<4x8xf32, #tpu.memory_space<vmem>>, vector<4x8xf32>
    %cst_7 = arith.constant dense<0.000000e+00> : vector<128x8xf32>
    %7 = tpu.matmul %0, %6, %cst_7 {dimension_numbers = #tpu.dot_dimension_numbers<[1], [0], [0], [1], [0, 0, 1, 1], [], []>} : vector<128x4xf32>, vector<4x8xf32>, vector<128x8xf32> -> vector<128x8xf32>
    %c0_8 = arith.constant 0 : index
    %c0_9 = arith.constant 0 : index
    %8 = vector.load %arg3[%c0_8, %c0_9] : memref<1x8xf32, #tpu.memory_space<vmem>>, vector<1x8xf32>
    %9 = vector.broadcast %8 : vector<1x8xf32> to vector<128x8xf32>
    %10 = arith.addf %7, %9 : vector<128x8xf32>
    %cst_10 = arith.constant 0.000000e+00 : f32
    %11 = vector.broadcast %cst_10 : f32 to vector<128x8xf32>
    %12 = arith.maximumf %10, %11 : vector<128x8xf32>
    %c0_11 = arith.constant 0 : index
    %c0_12 = arith.constant 0 : index
    %13 = vector.load %arg4[%c0_11, %c0_12] : memref<8x8xf32, #tpu.memory_space<vmem>>, vector<8x8xf32>
    %cst_13 = arith.constant dense<0.000000e+00> : vector<128x8xf32>
    %14 = tpu.matmul %12, %13, %cst_13 {dimension_numbers = #tpu.dot_dimension_numbers<[1], [0], [0], [1], [0, 0, 1, 1], [], []>} : vector<128x8xf32>, vector<8x8xf32>, vector<128x8xf32> -> vector<128x8xf32>
    %c0_14 = arith.constant 0 : index
    %c0_15 = arith.constant 0 : index
    %15 = vector.load %arg5[%c0_14, %c0_15] : memref<1x8xf32, #tpu.memory_space<vmem>>, vector<1x8xf32>
    %16 = vector.broadcast %15 : vector<1x8xf32> to vector<128x8xf32>
    %17 = arith.addf %14, %16 : vector<128x8xf32>
    %18 = arith.addf %17, %5 : vector<128x8xf32>
    %cst_16 = arith.constant 0.000000e+00 : f32
    %19 = vector.broadcast %cst_16 : f32 to vector<128x8xf32>
    %20 = arith.maximumf %18, %19 : vector<128x8xf32>
    %c0_17 = arith.constant 0 : index
    %c0_18 = arith.constant 0 : index
    %21 = vector.load %arg8[%c0_17, %c0_18] : memref<128x8xf32, #tpu.memory_space<vmem>>, vector<128x8xf32>
    tpu.vector_store %arg8[%c0_17, %c0_18], %20 {strides = array<i32>} : memref<128x8xf32, #tpu.memory_space<vmem>>, vector<128x8xf32>,
    return
  }
  func.func @transform_0(%arg0: i32) -> (i32, i32) {
    %c0_i32 = arith.constant 0 : i32
    %c0_i32_0 = arith.constant 0 : i32
    return %arg0, %c0_i32 : i32, i32
  }
  func.func @transform_1(%arg0: i32) -> (i32, i32) {
    %c0_i32 = arith.constant 0 : i32
    %c0_i32_0 = arith.constant 0 : i32
    %c0_i32_1 = arith.constant 0 : i32
    return %c0_i32, %c0_i32_0 : i32, i32
  }
  func.func @transform_2(%arg0: i32) -> (i32, i32) {
    %c0_i32 = arith.constant 0 : i32
    %c0_i32_0 = arith.constant 0 : i32
    %c0_i32_1 = arith.constant 0 : i32
    return %c0_i32, %c0_i32_0 : i32, i32
  }
  func.func @transform_3(%arg0: i32) -> (i32, i32) {
    %c0_i32 = arith.constant 0 : i32
    %c0_i32_0 = arith.constant 0 : i32
    %c0_i32_1 = arith.constant 0 : i32
    return %c0_i32, %c0_i32_0 : i32, i32
  }
  func.func @transform_4(%arg0: i32) -> (i32, i32) {
    %c0_i32 = arith.constant 0 : i32
    %c0_i32_0 = arith.constant 0 : i32
    %c0_i32_1 = arith.constant 0 : i32
    return %c0_i32, %c0_i32_0 : i32, i32
  }
  func.func @transform_5(%arg0: i32) -> (i32, i32) {
    %c0_i32 = arith.constant 0 : i32
    %c0_i32_0 = arith.constant 0 : i32
    %c0_i32_1 = arith.constant 0 : i32
    return %c0_i32, %c0_i32_0 : i32, i32
  }
  func.func @transform_6(%arg0: i32) -> (i32, i32) {
    %c0_i32 = arith.constant 0 : i32
    %c0_i32_0 = arith.constant 0 : i32
    %c0_i32_1 = arith.constant 0 : i32
    return %c0_i32, %c0_i32_0 : i32, i32
  }
  func.func @transform_7(%arg0: i32) -> (i32, i32) {
    %c0_i32 = arith.constant 0 : i32
    %c0_i32_0 = arith.constant 0 : i32
    return %arg0, %c0_i32 : i32, i32
  }
}

module attributes {stable_mosaic.version = 11 : i64} {
  func.func @_res_block_kernel_id(%arg0: i32, %arg1: memref<128x8xf32, #tpu.memory_space<vmem>>, %arg2: memref<8x8xf32, #tpu.memory_space<vmem>>, %arg3: memref<1x8xf32, #tpu.memory_space<vmem>>, %arg4: memref<8x8xf32, #tpu.memory_space<vmem>>, %arg5: memref<1x8xf32, #tpu.memory_space<vmem>>, %arg6: memref<128x8xf32, #tpu.memory_space<vmem>>) attributes {dimension_semantics = [#tpu.dimension_semantics<parallel>], iteration_bounds = array<i64: 1>, scalar_prefetch = 0 : i64, scratch_operands = 0 : i64, tpu.core_type = #tpu.core_type<tc>, window_params = [{transform_indices = @transform_0, window_bounds = array<i64: 128, 8>}, {pipeline_mode = #tpu.pipeline_mode<synchronous>, transform_indices = @transform_1, window_bounds = array<i64: 8, 8>}, {pipeline_mode = #tpu.pipeline_mode<synchronous>, transform_indices = @transform_2, window_bounds = array<i64: 1, 8>}, {pipeline_mode = #tpu.pipeline_mode<synchronous>, transform_indices = @transform_3, window_bounds = array<i64: 8, 8>}, {pipeline_mode = #tpu.pipeline_mode<synchronous>, transform_indices = @transform_4, window_bounds = array<i64: 1, 8>}, {transform_indices = @transform_5, window_bounds = array<i64: 128, 8>}]} {
    %c0 = arith.constant 0 : index
    %c0_0 = arith.constant 0 : index
    %0 = vector.load %arg1[%c0, %c0_0] : memref<128x8xf32, #tpu.memory_space<vmem>>, vector<128x8xf32>
    %c0_1 = arith.constant 0 : index
    %c0_2 = arith.constant 0 : index
    %1 = vector.load %arg2[%c0_1, %c0_2] : memref<8x8xf32, #tpu.memory_space<vmem>>, vector<8x8xf32>
    %cst = arith.constant dense<0.000000e+00> : vector<128x8xf32>
    %2 = tpu.matmul %0, %1, %cst {dimension_numbers = #tpu.dot_dimension_numbers<[1], [0], [0], [1], [0, 0, 1, 1], [], []>} : vector<128x8xf32>, vector<8x8xf32>, vector<128x8xf32> -> vector<128x8xf32>
    %c0_3 = arith.constant 0 : index
    %c0_4 = arith.constant 0 : index
    %3 = vector.load %arg3[%c0_3, %c0_4] : memref<1x8xf32, #tpu.memory_space<vmem>>, vector<1x8xf32>
    %4 = vector.broadcast %3 : vector<1x8xf32> to vector<128x8xf32>
    %5 = arith.addf %2, %4 : vector<128x8xf32>
    %cst_5 = arith.constant 0.000000e+00 : f32
    %6 = vector.broadcast %cst_5 : f32 to vector<128x8xf32>
    %7 = arith.maximumf %5, %6 : vector<128x8xf32>
    %c0_6 = arith.constant 0 : index
    %c0_7 = arith.constant 0 : index
    %8 = vector.load %arg4[%c0_6, %c0_7] : memref<8x8xf32, #tpu.memory_space<vmem>>, vector<8x8xf32>
    %cst_8 = arith.constant dense<0.000000e+00> : vector<128x8xf32>
    %9 = tpu.matmul %7, %8, %cst_8 {dimension_numbers = #tpu.dot_dimension_numbers<[1], [0], [0], [1], [0, 0, 1, 1], [], []>} : vector<128x8xf32>, vector<8x8xf32>, vector<128x8xf32> -> vector<128x8xf32>
    %c0_9 = arith.constant 0 : index
    %c0_10 = arith.constant 0 : index
    %10 = vector.load %arg5[%c0_9, %c0_10] : memref<1x8xf32, #tpu.memory_space<vmem>>, vector<1x8xf32>
    %11 = vector.broadcast %10 : vector<1x8xf32> to vector<128x8xf32>
    %12 = arith.addf %9, %11 : vector<128x8xf32>
    %13 = arith.addf %12, %0 : vector<128x8xf32>
    %cst_11 = arith.constant 0.000000e+00 : f32
    %14 = vector.broadcast %cst_11 : f32 to vector<128x8xf32>
    %15 = arith.maximumf %13, %14 : vector<128x8xf32>
    %c0_12 = arith.constant 0 : index
    %c0_13 = arith.constant 0 : index
    %16 = vector.load %arg6[%c0_12, %c0_13] : memref<128x8xf32, #tpu.memory_space<vmem>>, vector<128x8xf32>
    tpu.vector_store %arg6[%c0_12, %c0_13], %15 {strides = array<i32>} : memref<128x8xf32, #tpu.memory_space<vmem>>, vector<128x8xf32>,
    return
  }
  func.func @transform_0(%arg0: i32) -> (i32, i32) {
    %c0_i32 = arith.constant 0 : i32
    %c0_i32_0 = arith.constant 0 : i32
    return %arg0, %c0_i32 : i32, i32
  }
  func.func @transform_1(%arg0: i32) -> (i32, i32) {
    %c0_i32 = arith.constant 0 : i32
    %c0_i32_0 = arith.constant 0 : i32
    %c0_i32_1 = arith.constant 0 : i32
    return %c0_i32, %c0_i32_0 : i32, i32
  }
  func.func @transform_2(%arg0: i32) -> (i32, i32) {
    %c0_i32 = arith.constant 0 : i32
    %c0_i32_0 = arith.constant 0 : i32
    %c0_i32_1 = arith.constant 0 : i32
    return %c0_i32, %c0_i32_0 : i32, i32
  }
  func.func @transform_3(%arg0: i32) -> (i32, i32) {
    %c0_i32 = arith.constant 0 : i32
    %c0_i32_0 = arith.constant 0 : i32
    %c0_i32_1 = arith.constant 0 : i32
    return %c0_i32, %c0_i32_0 : i32, i32
  }
  func.func @transform_4(%arg0: i32) -> (i32, i32) {
    %c0_i32 = arith.constant 0 : i32
    %c0_i32_0 = arith.constant 0 : i32
    %c0_i32_1 = arith.constant 0 : i32
    return %c0_i32, %c0_i32_0 : i32, i32
  }
  func.func @transform_5(%arg0: i32) -> (i32, i32) {
    %c0_i32 = arith.constant 0 : i32
    %c0_i32_0 = arith.constant 0 : i32
    return %arg0, %c0_i32 : i32, i32
  }
}

</mosaic_0001>

<llo_original>
// kernel: reslayer_forward.3
$region0: #{reslayer_forward.3}
  #allocation0 [shape = 'u32[]', space=smem, size = 0x4, offset = 0x4, fixed_abs, tag = 'smem constant byte address 0x4 - core index']
  #allocation1 [shape = 'u32[144,128]{1,0:T(1,128)}', space=vmem, size = 0x12000, scoped, tag = 'internal scratch']
  %s0 = inlined_call_operand.vmem [shape: f32[128,8], index: 0, kind: input, shape index: {}]
  %s1 = inlined_call_operand.vmem [shape: f32[8,8], index: 1, kind: input, shape index: {}]
  %s2 = inlined_call_operand.vmem [shape: f32[1,8], index: 2, kind: input, shape index: {}]
  %s3 = inlined_call_operand.vmem [shape: f32[8,8], index: 3, kind: input, shape index: {}]
  %s4 = inlined_call_operand.vmem [shape: f32[1,8], index: 4, kind: input, shape index: {}]
  %s5 = inlined_call_operand.vmem [shape: f32[128,8], index: 5, kind: output, shape index: {}]
  %s6 = sld [smem:[#allocation0]]
  $region30: #{reslayer_forward.3} parent=0
    _
  %s8 = ssub.s32 1, %s6
  %s9 = scalar_select 0, %s8, %s6
  // Predicated region
  $region2: #{reslayer_forward.3} parent=0 // pred_check
    _
  $region3: #{reslayer_forward.3} parent=0 // pred_check_branch
    %11 = sbr.rel (0) target = $region5
  $region4: #{reslayer_forward.3} parent=0 // pred_region
    _
  $region5: #{reslayer_forward.3} parent=0 // pred_fallthru
    _
  // Predicated region
  $region6: #{reslayer_forward.3} parent=0 // pred_check
    _
  $region7: #{reslayer_forward.3} parent=0 // pred_check_branch
    %13 = sbr.rel (0) target = $region9
  $region8: #{reslayer_forward.3} parent=0 // pred_region
    _
  $region9: #{reslayer_forward.3} parent=0 // pred_fallthru
    _
  // Predicated region
  $region10: #{reslayer_forward.3} parent=0 // pred_check
    _
  $region11: #{reslayer_forward.3} parent=0 // pred_check_branch
    %15 = sbr.rel (0) target = $region13
  $region12: #{reslayer_forward.3} parent=0 // pred_region
    _
  $region13: #{reslayer_forward.3} parent=0 // pred_fallthru
    _
  // Predicated region
  $region14: #{reslayer_forward.3} parent=0 // pred_check
    _
  $region15: #{reslayer_forward.3} parent=0 // pred_check_branch
    %17 = sbr.rel (0) target = $region17
  $region16: #{reslayer_forward.3} parent=0 // pred_region
    _
  $region17: #{reslayer_forward.3} parent=0 // pred_fallthru
    _
  // Predicated region
  $region18: #{reslayer_forward.3} parent=0 // pred_check
    _
  $region19: #{reslayer_forward.3} parent=0 // pred_check_branch
    %19 = sbr.rel (0) target = $region21
  $region20: #{reslayer_forward.3} parent=0 // pred_region
    _
  $region21: #{reslayer_forward.3} parent=0 // pred_fallthru
    _
  %v20 = vld [vmem:[%s0] sm:$0xff]
  %v21 = vld [vmem:[%s0 + $0x8] sm:$0xff]
  %v22 = vld [vmem:[%s0 + $0x10] sm:$0xff]
  %v23 = vld [vmem:[%s0 + $0x18] sm:$0xff]
  %v24 = vld [vmem:[%s0 + $0x20] sm:$0xff]
  %v25 = vld [vmem:[%s0 + $0x28] sm:$0xff]
  %v26 = vld [vmem:[%s0 + $0x30] sm:$0xff]
  %v27 = vld [vmem:[%s0 + $0x38] sm:$0xff]
  %v28 = vld [vmem:[%s0 + $0x40] sm:$0xff]
  %v29 = vld [vmem:[%s0 + $0x48] sm:$0xff]
  %v30 = vld [vmem:[%s0 + $0x50] sm:$0xff]
  %v31 = vld [vmem:[%s0 + $0x58] sm:$0xff]
  %v32 = vld [vmem:[%s0 + $0x60] sm:$0xff]
  %v33 = vld [vmem:[%s0 + $0x68] sm:$0xff]
  %v34 = vld [vmem:[%s0 + $0x70] sm:$0xff]
  %v35 = vld [vmem:[%s0 + $0x78] sm:$0xff]
  %v36 = vld [vmem:[%s1] sm:$0xff]
  %v37 = vld [vmem:[%s2] sm:$0x1]
  %v39 = vlaneseq
  %v40 = vshrl.u32 %v39, 7
  %v41 = vsub.s32 0, %v40
  %v42 = vrot.slane %v37, %v41
  %vm44 = vcmask 64512
  %v46 = vsel %vm44, %v20, 0
  %v49 = vsel %vm44, %v21, 0
  %v52 = vsel %vm44, %v22, 0
  %v55 = vsel %vm44, %v23, 0
  %v58 = vsel %vm44, %v24, 0
  %v61 = vsel %vm44, %v25, 0
  %v64 = vsel %vm44, %v26, 0
  %v67 = vsel %vm44, %v27, 0
  %v70 = vsel %vm44, %v28, 0
  %v73 = vsel %vm44, %v29, 0
  %v76 = vsel %vm44, %v30, 0
  %v79 = vsel %vm44, %v31, 0
  %v82 = vsel %vm44, %v32, 0
  %v85 = vsel %vm44, %v33, 0
  %v88 = vsel %vm44, %v34, 0
  %v91 = vsel %vm44, %v35, 0
  %93 = vmatprep.subr.mxu0 0.0
  %94 = vmatpush1.msra.mxu0 %v36
  %95 = vmatprep.subr.mxu0 0.0
  %96 = vmatpush1.msra.mxu0 0.0
  %97 = vmatprep.subr.mxu0 0.0
  %98 = vmatpush1.msra.mxu0 0.0
  %99 = vmatprep.subr.mxu0 0.0
  %100 = vmatpush1.msra.mxu0 0.0
  %101 = vmatprep.subr.mxu0 0.0
  %102 = vmatpush1.msra.mxu0 0.0
  %103 = vmatprep.subr.mxu0 0.0
  %104 = vmatpush1.msra.mxu0 0.0
  %105 = vmatprep.subr.mxu0 0.0
  %106 = vmatpush1.msra.mxu0 0.0
  %107 = vmatprep.subr.mxu0 0.0
  %108 = vmatpush1.msra.mxu0 0.0
  %109 = vmatprep.subr.mxu0 0.0
  %110 = vmatpush1.msra.mxu0 0.0
  %111 = vmatprep.subr.mxu0 0.0
  %112 = vmatpush1.msra.mxu0 0.0
  %113 = vmatprep.subr.mxu0 0.0
  %114 = vmatpush1.msra.mxu0 0.0
  %115 = vmatprep.subr.mxu0 0.0
  %116 = vmatpush1.msra.mxu0 0.0
  %117 = vmatprep.subr.mxu0 0.0
  %118 = vmatpush1.msra.mxu0 0.0
  %119 = vmatprep.subr.mxu0 0.0
  %120 = vmatpush1.msra.mxu0 0.0
  %121 = vmatprep.subr.mxu0 0.0
  %122 = vmatpush1.msra.mxu0 0.0
  %123 = vmatprep.subr.mxu0 0.0
  %124 = vmatpush1.msra.mxu0 0.0
  %125 = vmatprep.subr.mxu0 0.0
  %126 = vmatpush1.msra.mxu0 0.0
  %127 = vmatprep.subr.mxu0 0.0
  %128 = vmatpush1.msra.mxu0 0.0
  %129 = vmatprep.subr.mxu0 0.0
  %130 = vmatpush1.msra.mxu0 0.0
  %131 = vmatprep.subr.mxu0 0.0
  %132 = vmatpush1.msra.mxu0 0.0
  %133 = vmatprep.subr.mxu0 0.0
  %134 = vmatpush1.msra.mxu0 0.0
  %135 = vmatprep.subr.mxu0 0.0
  %136 = vmatpush1.msra.mxu0 0.0
  %137 = vmatprep.subr.mxu0 0.0
  %138 = vmatpush1.msra.mxu0 0.0
  %139 = vmatprep.subr.mxu0 0.0
  %140 = vmatpush1.msra.mxu0 0.0
  %141 = vmatprep.subr.mxu0 0.0
  %142 = vmatpush1.msra.mxu0 0.0
  %143 = vmatprep.subr.mxu0 0.0
  %144 = vmatpush1.msra.mxu0 0.0
  %145 = vmatprep.subr.mxu0 0.0
  %146 = vmatpush1.msra.mxu0 0.0
  %147 = vmatprep.subr.mxu0 0.0
  %148 = vmatpush1.msra.mxu0 0.0
  %149 = vmatprep.subr.mxu0 0.0
  %150 = vmatpush1.msra.mxu0 0.0
  %151 = vmatprep.subr.mxu0 0.0
  %152 = vmatpush1.msra.mxu0 0.0
  %153 = vmatprep.subr.mxu0 0.0
  %154 = vmatpush1.msra.mxu0 0.0
  %155 = vmatprep.subr.mxu0 0.0
  %156 = vmatpush1.msra.mxu0 0.0
  %157 = vmatprep.mubr.f32.mxu0 0.0
  %158 = vmatmul.mubr.f32.gmra.mrb[0].mxu0 %v46
  %v159 = vpop.f32.mrb[0].mxu0
  %v160 = vadd.f32 %v42, %v159
  %v161 = vpop.f32.mrb[0].mxu0
  %162 = vmatprep.mubr.f32.mxu0 0.0
  %163 = vmatmul.mubr.f32.gmra.mrb[0].mxu0 %v49
  %v164 = vpop.f32.mrb[0].mxu0
  %v165 = vadd.f32 %v42, %v164
  %v166 = vpop.f32.mrb[0].mxu0
  %167 = vmatprep.mubr.f32.mxu0 0.0
  %168 = vmatmul.mubr.f32.gmra.mrb[0].mxu0 %v52
  %v169 = vpop.f32.mrb[0].mxu0
  %v170 = vadd.f32 %v42, %v169
  %v171 = vpop.f32.mrb[0].mxu0
  %172 = vmatprep.mubr.f32.mxu0 0.0
  %173 = vmatmul.mubr.f32.gmra.mrb[0].mxu0 %v55
  %v174 = vpop.f32.mrb[0].mxu0
  %v175 = vadd.f32 %v42, %v174
  %v176 = vpop.f32.mrb[0].mxu0
  %177 = vmatprep.mubr.f32.mxu0 0.0
  %178 = vmatmul.mubr.f32.gmra.mrb[0].mxu0 %v58
  %v179 = vpop.f32.mrb[0].mxu0
  %v180 = vadd.f32 %v42, %v179
  %v181 = vpop.f32.mrb[0].mxu0
  %182 = vmatprep.mubr.f32.mxu0 0.0
  %183 = vmatmul.mubr.f32.gmra.mrb[0].mxu0 %v61
  %v184 = vpop.f32.mrb[0].mxu0
  %v185 = vadd.f32 %v42, %v184
  %v186 = vpop.f32.mrb[0].mxu0
  %187 = vmatprep.mubr.f32.mxu0 0.0
  %188 = vmatmul.mubr.f32.gmra.mrb[0].mxu0 %v64
  %v189 = vpop.f32.mrb[0].mxu0
  %v190 = vadd.f32 %v42, %v189
  %v191 = vpop.f32.mrb[0].mxu0
  %192 = vmatprep.mubr.f32.mxu0 0.0
  %193 = vmatmul.mubr.f32.gmra.mrb[0].mxu0 %v67
  %v194 = vpop.f32.mrb[0].mxu0
  %v195 = vadd.f32 %v42, %v194
  %v196 = vpop.f32.mrb[0].mxu0
  %197 = vmatprep.mubr.f32.mxu0 0.0
  %198 = vmatmul.mubr.f32.gmra.mrb[0].mxu0 %v70
  %v199 = vpop.f32.mrb[0].mxu0
  %v200 = vadd.f32 %v42, %v199
  %v201 = vpop.f32.mrb[0].mxu0
  %202 = vmatprep.mubr.f32.mxu0 0.0
  %203 = vmatmul.mubr.f32.gmra.mrb[0].mxu0 %v73
  %v204 = vpop.f32.mrb[0].mxu0
  %v205 = vadd.f32 %v42, %v204
  %v206 = vpop.f32.mrb[0].mxu0
  %207 = vmatprep.mubr.f32.mxu0 0.0
  %208 = vmatmul.mubr.f32.gmra.mrb[0].mxu0 %v76
  %v209 = vpop.f32.mrb[0].mxu0
  %v210 = vadd.f32 %v42, %v209
  %v211 = vpop.f32.mrb[0].mxu0
  %212 = vmatprep.mubr.f32.mxu0 0.0
  %213 = vmatmul.mubr.f32.gmra.mrb[0].mxu0 %v79
  %v214 = vpop.f32.mrb[0].mxu0
  %v215 = vadd.f32 %v42, %v214
  %v216 = vpop.f32.mrb[0].mxu0
  %217 = vmatprep.mubr.f32.mxu0 0.0
  %218 = vmatmul.mubr.f32.gmra.mrb[0].mxu0 %v82
  %v219 = vpop.f32.mrb[0].mxu0
  %v220 = vadd.f32 %v42, %v219
  %v221 = vpop.f32.mrb[0].mxu0
  %222 = vmatprep.mubr.f32.mxu0 0.0
  %223 = vmatmul.mubr.f32.gmra.mrb[0].mxu0 %v85
  %v224 = vpop.f32.mrb[0].mxu0
  %v225 = vadd.f32 %v42, %v224
  %v226 = vpop.f32.mrb[0].mxu0
  %227 = vmatprep.mubr.f32.mxu0 0.0
  %228 = vmatmul.mubr.f32.gmra.mrb[0].mxu0 %v88
  %v229 = vpop.f32.mrb[0].mxu0
  %v230 = vadd.f32 %v42, %v229
  %v231 = vpop.f32.mrb[0].mxu0
  %232 = vmatprep.mubr.f32.mxu0 0.0
  %233 = vmatmul.mubr.f32.gmra.mrb[0].mxu0 %v91
  %v234 = vpop.f32.mrb[0].mxu0
  %v235 = vadd.f32 %v42, %v234
  %v236 = vpop.f32.mrb[0].mxu0
  %237 = vdwg.mxu0
  %v238 = vmax.f32 %v160, 0.0
  %v239 = vmax.f32 %v165, 0.0
  %v240 = vmax.f32 %v170, 0.0
  %v241 = vmax.f32 %v175, 0.0
  %v242 = vmax.f32 %v180, 0.0
  %v243 = vmax.f32 %v185, 0.0
  %v244 = vmax.f32 %v190, 0.0
  %v245 = vmax.f32 %v195, 0.0
  %v246 = vmax.f32 %v200, 0.0
  %v247 = vmax.f32 %v205, 0.0
  %v248 = vmax.f32 %v210, 0.0
  %v249 = vmax.f32 %v215, 0.0
  %v250 = vmax.f32 %v220, 0.0
  %v251 = vmax.f32 %v225, 0.0
  %v252 = vmax.f32 %v230, 0.0
  %v253 = vmax.f32 %v235, 0.0
  %v254 = vld [vmem:[%s3] sm:$0xff]
  %v255 = vld [vmem:[%s4] sm:$0x1]
  %v257 = vlaneseq
  %v258 = vshrl.u32 %v257, 7
  %v259 = vsub.s32 0, %v258
  %v260 = vrot.slane %v255, %v259
  %v263 = vsel %vm44, %v238, 0
  %v266 = vsel %vm44, %v239, 0
  %v269 = vsel %vm44, %v240, 0
  %v272 = vsel %vm44, %v241, 0
  %v275 = vsel %vm44, %v242, 0
  %v278 = vsel %vm44, %v243, 0
  %v281 = vsel %vm44, %v244, 0
  %v284 = vsel %vm44, %v245, 0
  %v287 = vsel %vm44, %v246, 0
  %v290 = vsel %vm44, %v247, 0
  %v293 = vsel %vm44, %v248, 0
  %v296 = vsel %vm44, %v249, 0
  %v299 = vsel %vm44, %v250, 0
  %v302 = vsel %vm44, %v251, 0
  %v305 = vsel %vm44, %v252, 0
  %v308 = vsel %vm44, %v253, 0
  %310 = vmatprep.subr.mxu0 0.0
  %311 = vmatpush1.msra.mxu0 %v254
  %312 = vmatprep.subr.mxu0 0.0
  %313 = vmatpush1.msra.mxu0 0.0
  %314 = vmatprep.subr.mxu0 0.0
  %315 = vmatpush1.msra.mxu0 0.0
  %316 = vmatprep.subr.mxu0 0.0
  %317 = vmatpush1.msra.mxu0 0.0
  %318 = vmatprep.subr.mxu0 0.0
  %319 = vmatpush1.msra.mxu0 0.0
  %320 = vmatprep.subr.mxu0 0.0
  %321 = vmatpush1.msra.mxu0 0.0
  %322 = vmatprep.subr.mxu0 0.0
  %323 = vmatpush1.msra.mxu0 0.0
  %324 = vmatprep.subr.mxu0 0.0
  %325 = vmatpush1.msra.mxu0 0.0
  %326 = vmatprep.subr.mxu0 0.0
  %327 = vmatpush1.msra.mxu0 0.0
  %328 = vmatprep.subr.mxu0 0.0
  %329 = vmatpush1.msra.mxu0 0.0
  %330 = vmatprep.subr.mxu0 0.0
  %331 = vmatpush1.msra.mxu0 0.0
  %332 = vmatprep.subr.mxu0 0.0
  %333 = vmatpush1.msra.mxu0 0.0
  %334 = vmatprep.subr.mxu0 0.0
  %335 = vmatpush1.msra.mxu0 0.0
  %336 = vmatprep.subr.mxu0 0.0
  %337 = vmatpush1.msra.mxu0 0.0
  %338 = vmatprep.subr.mxu0 0.0
  %339 = vmatpush1.msra.mxu0 0.0
  %340 = vmatprep.subr.mxu0 0.0
  %341 = vmatpush1.msra.mxu0 0.0
  %342 = vmatprep.subr.mxu0 0.0
  %343 = vmatpush1.msra.mxu0 0.0
  %344 = vmatprep.subr.mxu0 0.0
  %345 = vmatpush1.msra.mxu0 0.0
  %346 = vmatprep.subr.mxu0 0.0
  %347 = vmatpush1.msra.mxu0 0.0
  %348 = vmatprep.subr.mxu0 0.0
  %349 = vmatpush1.msra.mxu0 0.0
  %350 = vmatprep.subr.mxu0 0.0
  %351 = vmatpush1.msra.mxu0 0.0
  %352 = vmatprep.subr.mxu0 0.0
  %353 = vmatpush1.msra.mxu0 0.0
  %354 = vmatprep.subr.mxu0 0.0
  %355 = vmatpush1.msra.mxu0 0.0
  %356 = vmatprep.subr.mxu0 0.0
  %357 = vmatpush1.msra.mxu0 0.0
  %358 = vmatprep.subr.mxu0 0.0
  %359 = vmatpush1.msra.mxu0 0.0
  %360 = vmatprep.subr.mxu0 0.0
  %361 = vmatpush1.msra.mxu0 0.0
  %362 = vmatprep.subr.mxu0 0.0
  %363 = vmatpush1.msra.mxu0 0.0
  %364 = vmatprep.subr.mxu0 0.0
  %365 = vmatpush1.msra.mxu0 0.0
  %366 = vmatprep.subr.mxu0 0.0
  %367 = vmatpush1.msra.mxu0 0.0
  %368 = vmatprep.subr.mxu0 0.0
  %369 = vmatpush1.msra.mxu0 0.0
  %370 = vmatprep.subr.mxu0 0.0
  %371 = vmatpush1.msra.mxu0 0.0
  %372 = vmatprep.subr.mxu0 0.0
  %373 = vmatpush1.msra.mxu0 0.0
  %374 = vmatprep.mubr.f32.mxu0 0.0
  %375 = vmatmul.mubr.f32.gmra.mrb[0].mxu0 %v263
  %v376 = vpop.f32.mrb[0].mxu0
  %v377 = vadd.f32 %v260, %v376
  %v378 = vpop.f32.mrb[0].mxu0
  %379 = vmatprep.mubr.f32.mxu0 0.0
  %380 = vmatmul.mubr.f32.gmra.mrb[0].mxu0 %v266
  %v381 = vpop.f32.mrb[0].mxu0
  %v382 = vadd.f32 %v260, %v381
  %v383 = vpop.f32.mrb[0].mxu0
  %384 = vmatprep.mubr.f32.mxu0 0.0
  %385 = vmatmul.mubr.f32.gmra.mrb[0].mxu0 %v269
  %v386 = vpop.f32.mrb[0].mxu0
  %v387 = vadd.f32 %v260, %v386
  %v388 = vpop.f32.mrb[0].mxu0
  %389 = vmatprep.mubr.f32.mxu0 0.0
  %390 = vmatmul.mubr.f32.gmra.mrb[0].mxu0 %v272
  %v391 = vpop.f32.mrb[0].mxu0
  %v392 = vadd.f32 %v260, %v391
  %v393 = vpop.f32.mrb[0].mxu0
  %394 = vmatprep.mubr.f32.mxu0 0.0
  %395 = vmatmul.mubr.f32.gmra.mrb[0].mxu0 %v275
  %v396 = vpop.f32.mrb[0].mxu0
  %v397 = vadd.f32 %v260, %v396
  %v398 = vpop.f32.mrb[0].mxu0
  %399 = vmatprep.mubr.f32.mxu0 0.0
  %400 = vmatmul.mubr.f32.gmra.mrb[0].mxu0 %v278
  %v401 = vpop.f32.mrb[0].mxu0
  %v402 = vadd.f32 %v260, %v401
  %v403 = vpop.f32.mrb[0].mxu0
  %404 = vmatprep.mubr.f32.mxu0 0.0
  %405 = vmatmul.mubr.f32.gmra.mrb[0].mxu0 %v281
  %v406 = vpop.f32.mrb[0].mxu0
  %v407 = vadd.f32 %v260, %v406
  %v408 = vpop.f32.mrb[0].mxu0
  %409 = vmatprep.mubr.f32.mxu0 0.0
  %410 = vmatmul.mubr.f32.gmra.mrb[0].mxu0 %v284
  %v411 = vpop.f32.mrb[0].mxu0
  %v412 = vadd.f32 %v260, %v411
  %v413 = vpop.f32.mrb[0].mxu0
  %414 = vmatprep.mubr.f32.mxu0 0.0
  %415 = vmatmul.mubr.f32.gmra.mrb[0].mxu0 %v287
  %v416 = vpop.f32.mrb[0].mxu0
  %v417 = vadd.f32 %v260, %v416
  %v418 = vpop.f32.mrb[0].mxu0
  %419 = vmatprep.mubr.f32.mxu0 0.0
  %420 = vmatmul.mubr.f32.gmra.mrb[0].mxu0 %v290
  %v421 = vpop.f32.mrb[0].mxu0
  %v422 = vadd.f32 %v260, %v421
  %v423 = vpop.f32.mrb[0].mxu0
  %424 = vmatprep.mubr.f32.mxu0 0.0
  %425 = vmatmul.mubr.f32.gmra.mrb[0].mxu0 %v293
  %v426 = vpop.f32.mrb[0].mxu0
  %v427 = vadd.f32 %v260, %v426
  %v428 = vpop.f32.mrb[0].mxu0
  %429 = vmatprep.mubr.f32.mxu0 0.0
  %430 = vmatmul.mubr.f32.gmra.mrb[0].mxu0 %v296
  %v431 = vpop.f32.mrb[0].mxu0
  %v432 = vadd.f32 %v260, %v431
  %v433 = vpop.f32.mrb[0].mxu0
  %434 = vmatprep.mubr.f32.mxu0 0.0
  %435 = vmatmul.mubr.f32.gmra.mrb[0].mxu0 %v299
  %v436 = vpop.f32.mrb[0].mxu0
  %v437 = vadd.f32 %v260, %v436
  %v438 = vpop.f32.mrb[0].mxu0
  %439 = vmatprep.mubr.f32.mxu0 0.0
  %440 = vmatmul.mubr.f32.gmra.mrb[0].mxu0 %v302
  %v441 = vpop.f32.mrb[0].mxu0
  %v442 = vadd.f32 %v260, %v441
  %v443 = vpop.f32.mrb[0].mxu0
  %444 = vmatprep.mubr.f32.mxu0 0.0
  %445 = vmatmul.mubr.f32.gmra.mrb[0].mxu0 %v305
  %v446 = vpop.f32.mrb[0].mxu0
  %v447 = vadd.f32 %v260, %v446
  %v448 = vpop.f32.mrb[0].mxu0
  %449 = vmatprep.mubr.f32.mxu0 0.0
  %450 = vmatmul.mubr.f32.gmra.mrb[0].mxu0 %v308
  %v451 = vpop.f32.mrb[0].mxu0
  %v452 = vadd.f32 %v260, %v451
  %v453 = vpop.f32.mrb[0].mxu0
  %454 = vdwg.mxu0
  %v455 = vadd.f32 %v377, %v20
  %v456 = vadd.f32 %v382, %v21
  %v457 = vadd.f32 %v387, %v22
  %v458 = vadd.f32 %v392, %v23
  %v459 = vadd.f32 %v397, %v24
  %v460 = vadd.f32 %v402, %v25
  %v461 = vadd.f32 %v407, %v26
  %v462 = vadd.f32 %v412, %v27
  %v463 = vadd.f32 %v417, %v28
  %v464 = vadd.f32 %v422, %v29
  %v465 = vadd.f32 %v427, %v30
  %v466 = vadd.f32 %v432, %v31
  %v467 = vadd.f32 %v437, %v32
  %v468 = vadd.f32 %v442, %v33
  %v469 = vadd.f32 %v447, %v34
  %v470 = vadd.f32 %v452, %v35
  %v471 = vmax.f32 %v455, 0.0
  %v472 = vmax.f32 %v456, 0.0
  %v473 = vmax.f32 %v457, 0.0
  %v474 = vmax.f32 %v458, 0.0
  %v475 = vmax.f32 %v459, 0.0
  %v476 = vmax.f32 %v460, 0.0
  %v477 = vmax.f32 %v461, 0.0
  %v478 = vmax.f32 %v462, 0.0
  %v479 = vmax.f32 %v463, 0.0
  %v480 = vmax.f32 %v464, 0.0
  %v481 = vmax.f32 %v465, 0.0
  %v482 = vmax.f32 %v466, 0.0
  %v483 = vmax.f32 %v467, 0.0
  %v484 = vmax.f32 %v468, 0.0
  %v485 = vmax.f32 %v469, 0.0
  %v486 = vmax.f32 %v470, 0.0
  %487 = vst.msk [vmem:[%s5] sm:$0xff] %vm44, %v471
  %488 = vst.msk [vmem:[%s5 + $0x8] sm:$0xff] %vm44, %v472
  %489 = vst.msk [vmem:[%s5 + $0x10] sm:$0xff] %vm44, %v473
  %490 = vst.msk [vmem:[%s5 + $0x18] sm:$0xff] %vm44, %v474
  %491 = vst.msk [vmem:[%s5 + $0x20] sm:$0xff] %vm44, %v475
  %492 = vst.msk [vmem:[%s5 + $0x28] sm:$0xff] %vm44, %v476
  %493 = vst.msk [vmem:[%s5 + $0x30] sm:$0xff] %vm44, %v477
  %494 = vst.msk [vmem:[%s5 + $0x38] sm:$0xff] %vm44, %v478
  %495 = vst.msk [vmem:[%s5 + $0x40] sm:$0xff] %vm44, %v479
  %496 = vst.msk [vmem:[%s5 + $0x48] sm:$0xff] %vm44, %v480
  %497 = vst.msk [vmem:[%s5 + $0x50] sm:$0xff] %vm44, %v481
  %498 = vst.msk [vmem:[%s5 + $0x58] sm:$0xff] %vm44, %v482
  %499 = vst.msk [vmem:[%s5 + $0x60] sm:$0xff] %vm44, %v483
  %500 = vst.msk [vmem:[%s5 + $0x68] sm:$0xff] %vm44, %v484
  %501 = vst.msk [vmem:[%s5 + $0x70] sm:$0xff] %vm44, %v485
  %502 = vst.msk [vmem:[%s5 + $0x78] sm:$0xff] %vm44, %v486
  // Predicated region
  $region22: #{reslayer_forward.3} parent=0 // pred_check
    _
  $region23: #{reslayer_forward.3} parent=0 // pred_check_branch
    %504 = sbr.rel (0) target = $region25
  $region24: #{reslayer_forward.3} parent=0 // pred_region
    _
  $region25: #{reslayer_forward.3} parent=0 // pred_fallthru
    _
  // Predicated region
  $region26: #{reslayer_forward.3} parent=0 // pred_check
    _
  $region27: #{reslayer_forward.3} parent=0 // pred_check_branch
    %506 = sbr.rel (0) target = $region29
  $region28: #{reslayer_forward.3} parent=0 // pred_region
    _
  $region29: #{reslayer_forward.3} parent=0 // pred_fallthru
    _

// kernel: reslayer_forward.2
$region0: #{reslayer_forward.2}
  #allocation0 [shape = 'u32[]', space=smem, size = 0x4, offset = 0x4, fixed_abs, tag = 'smem constant byte address 0x4 - core index']
  #allocation1 [shape = 'u32[144,128]{1,0:T(1,128)}', space=vmem, size = 0x12000, scoped, tag = 'internal scratch']
  %s0 = inlined_call_operand.vmem [shape: f32[128,4], index: 0, kind: input, shape index: {}]
  %s1 = inlined_call_operand.vmem [shape: f32[4,8], index: 1, kind: input, shape index: {}]
  %s2 = inlined_call_operand.vmem [shape: f32[1,8], index: 2, kind: input, shape index: {}]
  %s3 = inlined_call_operand.vmem [shape: f32[8,8], index: 3, kind: input, shape index: {}]
  %s4 = inlined_call_operand.vmem [shape: f32[1,8], index: 4, kind: input, shape index: {}]
  %s5 = inlined_call_operand.vmem [shape: f32[4,8], index: 5, kind: input, shape index: {}]
  %s6 = inlined_call_operand.vmem [shape: f32[1,8], index: 6, kind: input, shape index: {}]
  %s7 = inlined_call_operand.vmem [shape: f32[128,8], index: 7, kind: output, shape index: {}]
  %s8 = sld [smem:[#allocation0]]
  $region38: #{reslayer_forward.2} parent=0
    _
  %s10 = ssub.s32 1, %s8
  %s11 = scalar_select 0, %s10, %s8
  // Predicated region
  $region2: #{reslayer_forward.2} parent=0 // pred_check
    _
  $region3: #{reslayer_forward.2} parent=0 // pred_check_branch
    %13 = sbr.rel (0) target = $region5
  $region4: #{reslayer_forward.2} parent=0 // pred_region
    _
  $region5: #{reslayer_forward.2} parent=0 // pred_fallthru
    _
  // Predicated region
  $region6: #{reslayer_forward.2} parent=0 // pred_check
    _
  $region7: #{reslayer_forward.2} parent=0 // pred_check_branch
    %15 = sbr.rel (0) target = $region9
  $region8: #{reslayer_forward.2} parent=0 // pred_region
    _
  $region9: #{reslayer_forward.2} parent=0 // pred_fallthru
    _
  // Predicated region
  $region10: #{reslayer_forward.2} parent=0 // pred_check
    _
  $region11: #{reslayer_forward.2} parent=0 // pred_check_branch
    %17 = sbr.rel (0) target = $region13
  $region12: #{reslayer_forward.2} parent=0 // pred_region
    _
  $region13: #{reslayer_forward.2} parent=0 // pred_fallthru
    _
  // Predicated region
  $region14: #{reslayer_forward.2} parent=0 // pred_check
    _
  $region15: #{reslayer_forward.2} parent=0 // pred_check_branch
    %19 = sbr.rel (0) target = $region17
  $region16: #{reslayer_forward.2} parent=0 // pred_region
    _
  $region17: #{reslayer_forward.2} parent=0 // pred_fallthru
    _
  // Predicated region
  $region18: #{reslayer_forward.2} parent=0 // pred_check
    _
  $region19: #{reslayer_forward.2} parent=0 // pred_check_branch
    %21 = sbr.rel (0) target = $region21
  $region20: #{reslayer_forward.2} parent=0 // pred_region
    _
  $region21: #{reslayer_forward.2} parent=0 // pred_fallthru
    _
  // Predicated region
  $region22: #{reslayer_forward.2} parent=0 // pred_check
    _
  $region23: #{reslayer_forward.2} parent=0 // pred_check_branch
    %23 = sbr.rel (0) target = $region25
  $region24: #{reslayer_forward.2} parent=0 // pred_region
    _
  $region25: #{reslayer_forward.2} parent=0 // pred_fallthru
    _
  // Predicated region
  $region26: #{reslayer_forward.2} parent=0 // pred_check
    _
  $region27: #{reslayer_forward.2} parent=0 // pred_check_branch
    %25 = sbr.rel (0) target = $region29
  $region28: #{reslayer_forward.2} parent=0 // pred_region
    _
  $region29: #{reslayer_forward.2} parent=0 // pred_fallthru
    _
  %v26 = vld [vmem:[%s0] sm:$0xff]
  %v27 = vld [vmem:[%s0 + $0x8] sm:$0xff]
  %v28 = vld [vmem:[%s0 + $0x10] sm:$0xff]
  %v29 = vld [vmem:[%s0 + $0x18] sm:$0xff]
  %v30 = vld [vmem:[%s0 + $0x20] sm:$0xff]
  %v31 = vld [vmem:[%s0 + $0x28] sm:$0xff]
  %v32 = vld [vmem:[%s0 + $0x30] sm:$0xff]
  %v33 = vld [vmem:[%s0 + $0x38] sm:$0xff]
  %v34 = vld [vmem:[%s0 + $0x40] sm:$0xff]
  %v35 = vld [vmem:[%s0 + $0x48] sm:$0xff]
  %v36 = vld [vmem:[%s0 + $0x50] sm:$0xff]
  %v37 = vld [vmem:[%s0 + $0x58] sm:$0xff]
  %v38 = vld [vmem:[%s0 + $0x60] sm:$0xff]
  %v39 = vld [vmem:[%s0 + $0x68] sm:$0xff]
  %v40 = vld [vmem:[%s0 + $0x70] sm:$0xff]
  %v41 = vld [vmem:[%s0 + $0x78] sm:$0xff]
  %v42 = vld [vmem:[%s5] sm:$0xf]
  %v43 = vld [vmem:[%s6] sm:$0x1]
  %v45 = vlaneseq
  %v46 = vshrl.u32 %v45, 7
  %v47 = vsub.s32 0, %v46
  %v48 = vrot.slane %v43, %v47
  %vm50 = vcmask 31744
  %v52 = vsel %vm50, %v26, 0
  %v55 = vsel %vm50, %v27, 0
  %v58 = vsel %vm50, %v28, 0
  %v61 = vsel %vm50, %v29, 0
  %v64 = vsel %vm50, %v30, 0
  %v67 = vsel %vm50, %v31, 0
  %v70 = vsel %vm50, %v32, 0
  %v73 = vsel %vm50, %v33, 0
  %v76 = vsel %vm50, %v34, 0
  %v79 = vsel %vm50, %v35, 0
  %v82 = vsel %vm50, %v36, 0
  %v85 = vsel %vm50, %v37, 0
  %v88 = vsel %vm50, %v38, 0
  %v91 = vsel %vm50, %v39, 0
  %v94 = vsel %vm50, %v40, 0
  %v97 = vsel %vm50, %v41, 0
  %vm99 = vcmask 1043456
  %v101 = vsel %vm99, %v42, 0
  %103 = vmatprep.subr.mxu0 0.0
  %104 = vmatpush1.msra.mxu0 %v101
  %105 = vmatprep.subr.mxu0 0.0
  %106 = vmatpush1.msra.mxu0 0.0
  %107 = vmatprep.subr.mxu0 0.0
  %108 = vmatpush1.msra.mxu0 0.0
  %109 = vmatprep.subr.mxu0 0.0
  %110 = vmatpush1.msra.mxu0 0.0
  %111 = vmatprep.subr.mxu0 0.0
  %112 = vmatpush1.msra.mxu0 0.0
  %113 = vmatprep.subr.mxu0 0.0
  %114 = vmatpush1.msra.mxu0 0.0
  %115 = vmatprep.subr.mxu0 0.0
  %116 = vmatpush1.msra.mxu0 0.0
  %117 = vmatprep.subr.mxu0 0.0
  %118 = vmatpush1.msra.mxu0 0.0
  %119 = vmatprep.subr.mxu0 0.0
  %120 = vmatpush1.msra.mxu0 0.0
  %121 = vmatprep.subr.mxu0 0.0
  %122 = vmatpush1.msra.mxu0 0.0
  %123 = vmatprep.subr.mxu0 0.0
  %124 = vmatpush1.msra.mxu0 0.0
  %125 = vmatprep.subr.mxu0 0.0
  %126 = vmatpush1.msra.mxu0 0.0
  %127 = vmatprep.subr.mxu0 0.0
  %128 = vmatpush1.msra.mxu0 0.0
  %129 = vmatprep.subr.mxu0 0.0
  %130 = vmatpush1.msra.mxu0 0.0
  %131 = vmatprep.subr.mxu0 0.0
  %132 = vmatpush1.msra.mxu0 0.0
  %133 = vmatprep.subr.mxu0 0.0
  %134 = vmatpush1.msra.mxu0 0.0
  %135 = vmatprep.subr.mxu0 0.0
  %136 = vmatpush1.msra.mxu0 0.0
  %137 = vmatprep.subr.mxu0 0.0
  %138 = vmatpush1.msra.mxu0 0.0
  %139 = vmatprep.subr.mxu0 0.0
  %140 = vmatpush1.msra.mxu0 0.0
  %141 = vmatprep.subr.mxu0 0.0
  %142 = vmatpush1.msra.mxu0 0.0
  %143 = vmatprep.subr.mxu0 0.0
  %144 = vmatpush1.msra.mxu0 0.0
  %145 = vmatprep.subr.mxu0 0.0
  %146 = vmatpush1.msra.mxu0 0.0
  %147 = vmatprep.subr.mxu0 0.0
  %148 = vmatpush1.msra.mxu0 0.0
  %149 = vmatprep.subr.mxu0 0.0
  %150 = vmatpush1.msra.mxu0 0.0
  %151 = vmatprep.subr.mxu0 0.0
  %152 = vmatpush1.msra.mxu0 0.0
  %153 = vmatprep.subr.mxu0 0.0
  %154 = vmatpush1.msra.mxu0 0.0
  %155 = vmatprep.subr.mxu0 0.0
  %156 = vmatpush1.msra.mxu0 0.0
  %157 = vmatprep.subr.mxu0 0.0
  %158 = vmatpush1.msra.mxu0 0.0
  %159 = vmatprep.subr.mxu0 0.0
  %160 = vmatpush1.msra.mxu0 0.0
  %161 = vmatprep.subr.mxu0 0.0
  %162 = vmatpush1.msra.mxu0 0.0
  %163 = vmatprep.subr.mxu0 0.0
  %164 = vmatpush1.msra.mxu0 0.0
  %165 = vmatprep.subr.mxu0 0.0
  %166 = vmatpush1.msra.mxu0 0.0
  %167 = vmatprep.mubr.f32.mxu0 0.0
  %168 = vmatmul.mubr.f32.gmra.mrb[0].mxu0 %v52
  %v169 = vpop.f32.mrb[0].mxu0
  %v170 = vadd.f32 %v48, %v169
  %v171 = vpop.f32.mrb[0].mxu0
  %172 = vmatprep.mubr.f32.mxu0 0.0
  %173 = vmatmul.mubr.f32.gmra.mrb[0].mxu0 %v55
  %v174 = vpop.f32.mrb[0].mxu0
  %v175 = vadd.f32 %v48, %v174
  %v176 = vpop.f32.mrb[0].mxu0
  %177 = vmatprep.mubr.f32.mxu0 0.0
  %178 = vmatmul.mubr.f32.gmra.mrb[0].mxu0 %v58
  %v179 = vpop.f32.mrb[0].mxu0
  %v180 = vadd.f32 %v48, %v179
  %v181 = vpop.f32.mrb[0].mxu0
  %182 = vmatprep.mubr.f32.mxu0 0.0
  %183 = vmatmul.mubr.f32.gmra.mrb[0].mxu0 %v61
  %v184 = vpop.f32.mrb[0].mxu0
  %v185 = vadd.f32 %v48, %v184
  %v186 = vpop.f32.mrb[0].mxu0
  %187 = vmatprep.mubr.f32.mxu0 0.0
  %188 = vmatmul.mubr.f32.gmra.mrb[0].mxu0 %v64
  %v189 = vpop.f32.mrb[0].mxu0
  %v190 = vadd.f32 %v48, %v189
  %v191 = vpop.f32.mrb[0].mxu0
  %192 = vmatprep.mubr.f32.mxu0 0.0
  %193 = vmatmul.mubr.f32.gmra.mrb[0].mxu0 %v67
  %v194 = vpop.f32.mrb[0].mxu0
  %v195 = vadd.f32 %v48, %v194
  %v196 = vpop.f32.mrb[0].mxu0
  %197 = vmatprep.mubr.f32.mxu0 0.0
  %198 = vmatmul.mubr.f32.gmra.mrb[0].mxu0 %v70
  %v199 = vpop.f32.mrb[0].mxu0
  %v200 = vadd.f32 %v48, %v199
  %v201 = vpop.f32.mrb[0].mxu0
  %202 = vmatprep.mubr.f32.mxu0 0.0
  %203 = vmatmul.mubr.f32.gmra.mrb[0].mxu0 %v73
  %v204 = vpop.f32.mrb[0].mxu0
  %v205 = vadd.f32 %v48, %v204
  %v206 = vpop.f32.mrb[0].mxu0
  %207 = vmatprep.mubr.f32.mxu0 0.0
  %208 = vmatmul.mubr.f32.gmra.mrb[0].mxu0 %v76
  %v209 = vpop.f32.mrb[0].mxu0
  %v210 = vadd.f32 %v48, %v209
  %v211 = vpop.f32.mrb[0].mxu0
  %212 = vmatprep.mubr.f32.mxu0 0.0
  %213 = vmatmul.mubr.f32.gmra.mrb[0].mxu0 %v79
  %v214 = vpop.f32.mrb[0].mxu0
  %v215 = vadd.f32 %v48, %v214
  %v216 = vpop.f32.mrb[0].mxu0
  %217 = vmatprep.mubr.f32.mxu0 0.0
  %218 = vmatmul.mubr.f32.gmra.mrb[0].mxu0 %v82
  %v219 = vpop.f32.mrb[0].mxu0
  %v220 = vadd.f32 %v48, %v219
  %v221 = vpop.f32.mrb[0].mxu0
  %222 = vmatprep.mubr.f32.mxu0 0.0
  %223 = vmatmul.mubr.f32.gmra.mrb[0].mxu0 %v85
  %v224 = vpop.f32.mrb[0].mxu0
  %v225 = vadd.f32 %v48, %v224
  %v226 = vpop.f32.mrb[0].mxu0
  %227 = vmatprep.mubr.f32.mxu0 0.0
  %228 = vmatmul.mubr.f32.gmra.mrb[0].mxu0 %v88
  %v229 = vpop.f32.mrb[0].mxu0
  %v230 = vadd.f32 %v48, %v229
  %v231 = vpop.f32.mrb[0].mxu0
  %232 = vmatprep.mubr.f32.mxu0 0.0
  %233 = vmatmul.mubr.f32.gmra.mrb[0].mxu0 %v91
  %v234 = vpop.f32.mrb[0].mxu0
  %v235 = vadd.f32 %v48, %v234
  %v236 = vpop.f32.mrb[0].mxu0
  %237 = vmatprep.mubr.f32.mxu0 0.0
  %238 = vmatmul.mubr.f32.gmra.mrb[0].mxu0 %v94
  %v239 = vpop.f32.mrb[0].mxu0
  %v240 = vadd.f32 %v48, %v239
  %v241 = vpop.f32.mrb[0].mxu0
  %242 = vmatprep.mubr.f32.mxu0 0.0
  %243 = vmatmul.mubr.f32.gmra.mrb[0].mxu0 %v97
  %v244 = vpop.f32.mrb[0].mxu0
  %v245 = vadd.f32 %v48, %v244
  %v246 = vpop.f32.mrb[0].mxu0
  %247 = vdwg.mxu0
  %v248 = vld [vmem:[%s1] sm:$0xf]
  %v249 = vld [vmem:[%s2] sm:$0x1]
  %v251 = vlaneseq
  %v252 = vshrl.u32 %v251, 7
  %v253 = vsub.s32 0, %v252
  %v254 = vrot.slane %v249, %v253
  %v257 = vsel %vm99, %v248, 0
  %259 = vmatprep.subr.mxu0 0.0
  %260 = vmatpush1.msra.mxu0 %v257
  %261 = vmatprep.subr.mxu0 0.0
  %262 = vmatpush1.msra.mxu0 0.0
  %263 = vmatprep.subr.mxu0 0.0
  %264 = vmatpush1.msra.mxu0 0.0
  %265 = vmatprep.subr.mxu0 0.0
  %266 = vmatpush1.msra.mxu0 0.0
  %267 = vmatprep.subr.mxu0 0.0
  %268 = vmatpush1.msra.mxu0 0.0
  %269 = vmatprep.subr.mxu0 0.0
  %270 = vmatpush1.msra.mxu0 0.0
  %271 = vmatprep.subr.mxu0 0.0
  %272 = vmatpush1.msra.mxu0 0.0
  %273 = vmatprep.subr.mxu0 0.0
  %274 = vmatpush1.msra.mxu0 0.0
  %275 = vmatprep.subr.mxu0 0.0
  %276 = vmatpush1.msra.mxu0 0.0
  %277 = vmatprep.subr.mxu0 0.0
  %278 = vmatpush1.msra.mxu0 0.0
  %279 = vmatprep.subr.mxu0 0.0
  %280 = vmatpush1.msra.mxu0 0.0
  %281 = vmatprep.subr.mxu0 0.0
  %282 = vmatpush1.msra.mxu0 0.0
  %283 = vmatprep.subr.mxu0 0.0
  %284 = vmatpush1.msra.mxu0 0.0
  %285 = vmatprep.subr.mxu0 0.0
  %286 = vmatpush1.msra.mxu0 0.0
  %287 = vmatprep.subr.mxu0 0.0
  %288 = vmatpush1.msra.mxu0 0.0
  %289 = vmatprep.subr.mxu0 0.0
  %290 = vmatpush1.msra.mxu0 0.0
  %291 = vmatprep.subr.mxu0 0.0
  %292 = vmatpush1.msra.mxu0 0.0
  %293 = vmatprep.subr.mxu0 0.0
  %294 = vmatpush1.msra.mxu0 0.0
  %295 = vmatprep.subr.mxu0 0.0
  %296 = vmatpush1.msra.mxu0 0.0
  %297 = vmatprep.subr.mxu0 0.0
  %298 = vmatpush1.msra.mxu0 0.0
  %299 = vmatprep.subr.mxu0 0.0
  %300 = vmatpush1.msra.mxu0 0.0
  %301 = vmatprep.subr.mxu0 0.0
  %302 = vmatpush1.msra.mxu0 0.0
  %303 = vmatprep.subr.mxu0 0.0
  %304 = vmatpush1.msra.mxu0 0.0
  %305 = vmatprep.subr.mxu0 0.0
  %306 = vmatpush1.msra.mxu0 0.0
  %307 = vmatprep.subr.mxu0 0.0
  %308 = vmatpush1.msra.mxu0 0.0
  %309 = vmatprep.subr.mxu0 0.0
  %310 = vmatpush1.msra.mxu0 0.0
  %311 = vmatprep.subr.mxu0 0.0
  %312 = vmatpush1.msra.mxu0 0.0
  %313 = vmatprep.subr.mxu0 0.0
  %314 = vmatpush1.msra.mxu0 0.0
  %315 = vmatprep.subr.mxu0 0.0
  %316 = vmatpush1.msra.mxu0 0.0
  %317 = vmatprep.subr.mxu0 0.0
  %318 = vmatpush1.msra.mxu0 0.0
  %319 = vmatprep.subr.mxu0 0.0
  %320 = vmatpush1.msra.mxu0 0.0
  %321 = vmatprep.subr.mxu0 0.0
  %322 = vmatpush1.msra.mxu0 0.0
  %323 = vmatprep.mubr.f32.mxu0 0.0
  %324 = vmatmul.mubr.f32.gmra.mrb[0].mxu0 %v52
  %v325 = vpop.f32.mrb[0].mxu0
  %v326 = vadd.f32 %v254, %v325
  %v327 = vpop.f32.mrb[0].mxu0
  %328 = vmatprep.mubr.f32.mxu0 0.0
  %329 = vmatmul.mubr.f32.gmra.mrb[0].mxu0 %v55
  %v330 = vpop.f32.mrb[0].mxu0
  %v331 = vadd.f32 %v254, %v330
  %v332 = vpop.f32.mrb[0].mxu0
  %333 = vmatprep.mubr.f32.mxu0 0.0
  %334 = vmatmul.mubr.f32.gmra.mrb[0].mxu0 %v58
  %v335 = vpop.f32.mrb[0].mxu0
  %v336 = vadd.f32 %v254, %v335
  %v337 = vpop.f32.mrb[0].mxu0
  %338 = vmatprep.mubr.f32.mxu0 0.0
  %339 = vmatmul.mubr.f32.gmra.mrb[0].mxu0 %v61
  %v340 = vpop.f32.mrb[0].mxu0
  %v341 = vadd.f32 %v254, %v340
  %v342 = vpop.f32.mrb[0].mxu0
  %343 = vmatprep.mubr.f32.mxu0 0.0
  %344 = vmatmul.mubr.f32.gmra.mrb[0].mxu0 %v64
  %v345 = vpop.f32.mrb[0].mxu0
  %v346 = vadd.f32 %v254, %v345
  %v347 = vpop.f32.mrb[0].mxu0
  %348 = vmatprep.mubr.f32.mxu0 0.0
  %349 = vmatmul.mubr.f32.gmra.mrb[0].mxu0 %v67
  %v350 = vpop.f32.mrb[0].mxu0
  %v351 = vadd.f32 %v254, %v350
  %v352 = vpop.f32.mrb[0].mxu0
  %353 = vmatprep.mubr.f32.mxu0 0.0
  %354 = vmatmul.mubr.f32.gmra.mrb[0].mxu0 %v70
  %v355 = vpop.f32.mrb[0].mxu0
  %v356 = vadd.f32 %v254, %v355
  %v357 = vpop.f32.mrb[0].mxu0
  %358 = vmatprep.mubr.f32.mxu0 0.0
  %359 = vmatmul.mubr.f32.gmra.mrb[0].mxu0 %v73
  %v360 = vpop.f32.mrb[0].mxu0
  %v361 = vadd.f32 %v254, %v360
  %v362 = vpop.f32.mrb[0].mxu0
  %363 = vmatprep.mubr.f32.mxu0 0.0
  %364 = vmatmul.mubr.f32.gmra.mrb[0].mxu0 %v76
  %v365 = vpop.f32.mrb[0].mxu0
  %v366 = vadd.f32 %v254, %v365
  %v367 = vpop.f32.mrb[0].mxu0
  %368 = vmatprep.mubr.f32.mxu0 0.0
  %369 = vmatmul.mubr.f32.gmra.mrb[0].mxu0 %v79
  %v370 = vpop.f32.mrb[0].mxu0
  %v371 = vadd.f32 %v254, %v370
  %v372 = vpop.f32.mrb[0].mxu0
  %373 = vmatprep.mubr.f32.mxu0 0.0
  %374 = vmatmul.mubr.f32.gmra.mrb[0].mxu0 %v82
  %v375 = vpop.f32.mrb[0].mxu0
  %v376 = vadd.f32 %v254, %v375
  %v377 = vpop.f32.mrb[0].mxu0
  %378 = vmatprep.mubr.f32.mxu0 0.0
  %379 = vmatmul.mubr.f32.gmra.mrb[0].mxu0 %v85
  %v380 = vpop.f32.mrb[0].mxu0
  %v381 = vadd.f32 %v254, %v380
  %v382 = vpop.f32.mrb[0].mxu0
  %383 = vmatprep.mubr.f32.mxu0 0.0
  %384 = vmatmul.mubr.f32.gmra.mrb[0].mxu0 %v88
  %v385 = vpop.f32.mrb[0].mxu0
  %v386 = vadd.f32 %v254, %v385
  %v387 = vpop.f32.mrb[0].mxu0
  %388 = vmatprep.mubr.f32.mxu0 0.0
  %389 = vmatmul.mubr.f32.gmra.mrb[0].mxu0 %v91
  %v390 = vpop.f32.mrb[0].mxu0
  %v391 = vadd.f32 %v254, %v390
  %v392 = vpop.f32.mrb[0].mxu0
  %393 = vmatprep.mubr.f32.mxu0 0.0
  %394 = vmatmul.mubr.f32.gmra.mrb[0].mxu0 %v94
  %v395 = vpop.f32.mrb[0].mxu0
  %v396 = vadd.f32 %v254, %v395
  %v397 = vpop.f32.mrb[0].mxu0
  %398 = vmatprep.mubr.f32.mxu0 0.0
  %399 = vmatmul.mubr.f32.gmra.mrb[0].mxu0 %v97
  %v400 = vpop.f32.mrb[0].mxu0
  %v401 = vadd.f32 %v254, %v400
  %v402 = vpop.f32.mrb[0].mxu0
  %403 = vdwg.mxu0
  %v404 = vmax.f32 %v326, 0.0
  %v405 = vmax.f32 %v331, 0.0
  %v406 = vmax.f32 %v336, 0.0
  %v407 = vmax.f32 %v341, 0.0
  %v408 = vmax.f32 %v346, 0.0
  %v409 = vmax.f32 %v351, 0.0
  %v410 = vmax.f32 %v356, 0.0
  %v411 = vmax.f32 %v361, 0.0
  %v412 = vmax.f32 %v366, 0.0
  %v413 = vmax.f32 %v371, 0.0
  %v414 = vmax.f32 %v376, 0.0
  %v415 = vmax.f32 %v381, 0.0
  %v416 = vmax.f32 %v386, 0.0
  %v417 = vmax.f32 %v391, 0.0
  %v418 = vmax.f32 %v396, 0.0
  %v419 = vmax.f32 %v401, 0.0
  %v420 = vld [vmem:[%s3] sm:$0xff]
  %v421 = vld [vmem:[%s4] sm:$0x1]
  %v423 = vlaneseq
  %v424 = vshrl.u32 %v423, 7
  %v425 = vsub.s32 0, %v424
  %v426 = vrot.slane %v421, %v425
  %vm428 = vcmask 64512
  %v430 = vsel %vm428, %v404, 0
  %v433 = vsel %vm428, %v405, 0
  %v436 = vsel %vm428, %v406, 0
  %v439 = vsel %vm428, %v407, 0
  %v442 = vsel %vm428, %v408, 0
  %v445 = vsel %vm428, %v409, 0
  %v448 = vsel %vm428, %v410, 0
  %v451 = vsel %vm428, %v411, 0
  %v454 = vsel %vm428, %v412, 0
  %v457 = vsel %vm428, %v413, 0
  %v460 = vsel %vm428, %v414, 0
  %v463 = vsel %vm428, %v415, 0
  %v466 = vsel %vm428, %v416, 0
  %v469 = vsel %vm428, %v417, 0
  %v472 = vsel %vm428, %v418, 0
  %v475 = vsel %vm428, %v419, 0
  %477 = vmatprep.subr.mxu0 0.0
  %478 = vmatpush1.msra.mxu0 %v420
  %479 = vmatprep.subr.mxu0 0.0
  %480 = vmatpush1.msra.mxu0 0.0
  %481 = vmatprep.subr.mxu0 0.0
  %482 = vmatpush1.msra.mxu0 0.0
  %483 = vmatprep.subr.mxu0 0.0
  %484 = vmatpush1.msra.mxu0 0.0
  %485 = vmatprep.subr.mxu0 0.0
  %486 = vmatpush1.msra.mxu0 0.0
  %487 = vmatprep.subr.mxu0 0.0
  %488 = vmatpush1.msra.mxu0 0.0
  %489 = vmatprep.subr.mxu0 0.0
  %490 = vmatpush1.msra.mxu0 0.0
  %491 = vmatprep.subr.mxu0 0.0
  %492 = vmatpush1.msra.mxu0 0.0
  %493 = vmatprep.subr.mxu0 0.0
  %494 = vmatpush1.msra.mxu0 0.0
  %495 = vmatprep.subr.mxu0 0.0
  %496 = vmatpush1.msra.mxu0 0.0
  %497 = vmatprep.subr.mxu0 0.0
  %498 = vmatpush1.msra.mxu0 0.0
  %499 = vmatprep.subr.mxu0 0.0
  %500 = vmatpush1.msra.mxu0 0.0
  %501 = vmatprep.subr.mxu0 0.0
  %502 = vmatpush1.msra.mxu0 0.0
  %503 = vmatprep.subr.mxu0 0.0
  %504 = vmatpush1.msra.mxu0 0.0
  %505 = vmatprep.subr.mxu0 0.0
  %506 = vmatpush1.msra.mxu0 0.0
  %507 = vmatprep.subr.mxu0 0.0
  %508 = vmatpush1.msra.mxu0 0.0
  %509 = vmatprep.subr.mxu0 0.0
  %510 = vmatpush1.msra.mxu0 0.0
  %511 = vmatprep.subr.mxu0 0.0
  %512 = vmatpush1.msra.mxu0 0.0
  %513 = vmatprep.subr.mxu0 0.0
  %514 = vmatpush1.msra.mxu0 0.0
  %515 = vmatprep.subr.mxu0 0.0
  %516 = vmatpush1.msra.mxu0 0.0
  %517 = vmatprep.subr.mxu0 0.0
  %518 = vmatpush1.msra.mxu0 0.0
  %519 = vmatprep.subr.mxu0 0.0
  %520 = vmatpush1.msra.mxu0 0.0
  %521 = vmatprep.subr.mxu0 0.0
  %522 = vmatpush1.msra.mxu0 0.0
  %523 = vmatprep.subr.mxu0 0.0
  %524 = vmatpush1.msra.mxu0 0.0
  %525 = vmatprep.subr.mxu0 0.0
  %526 = vmatpush1.msra.mxu0 0.0
  %527 = vmatprep.subr.mxu0 0.0
  %528 = vmatpush1.msra.mxu0 0.0
  %529 = vmatprep.subr.mxu0 0.0
  %530 = vmatpush1.msra.mxu0 0.0
  %531 = vmatprep.subr.mxu0 0.0
  %532 = vmatpush1.msra.mxu0 0.0
  %533 = vmatprep.subr.mxu0 0.0
  %534 = vmatpush1.msra.mxu0 0.0
  %535 = vmatprep.subr.mxu0 0.0
  %536 = vmatpush1.msra.mxu0 0.0
  %537 = vmatprep.subr.mxu0 0.0
  %538 = vmatpush1.msra.mxu0 0.0
  %539 = vmatprep.subr.mxu0 0.0
  %540 = vmatpush1.msra.mxu0 0.0
  %541 = vmatprep.mubr.f32.mxu0 0.0
  %542 = vmatmul.mubr.f32.gmra.mrb[0].mxu0 %v430
  %v543 = vpop.f32.mrb[0].mxu0
  %v544 = vadd.f32 %v426, %v543
  %v545 = vpop.f32.mrb[0].mxu0
  %546 = vmatprep.mubr.f32.mxu0 0.0
  %547 = vmatmul.mubr.f32.gmra.mrb[0].mxu0 %v433
  %v548 = vpop.f32.mrb[0].mxu0
  %v549 = vadd.f32 %v426, %v548
  %v550 = vpop.f32.mrb[0].mxu0
  %551 = vmatprep.mubr.f32.mxu0 0.0
  %552 = vmatmul.mubr.f32.gmra.mrb[0].mxu0 %v436
  %v553 = vpop.f32.mrb[0].mxu0
  %v554 = vadd.f32 %v426, %v553
  %v555 = vpop.f32.mrb[0].mxu0
  %556 = vmatprep.mubr.f32.mxu0 0.0
  %557 = vmatmul.mubr.f32.gmra.mrb[0].mxu0 %v439
  %v558 = vpop.f32.mrb[0].mxu0
  %v559 = vadd.f32 %v426, %v558
  %v560 = vpop.f32.mrb[0].mxu0
  %561 = vmatprep.mubr.f32.mxu0 0.0
  %562 = vmatmul.mubr.f32.gmra.mrb[0].mxu0 %v442
  %v563 = vpop.f32.mrb[0].mxu0
  %v564 = vadd.f32 %v426, %v563
  %v565 = vpop.f32.mrb[0].mxu0
  %566 = vmatprep.mubr.f32.mxu0 0.0
  %567 = vmatmul.mubr.f32.gmra.mrb[0].mxu0 %v445
  %v568 = vpop.f32.mrb[0].mxu0
  %v569 = vadd.f32 %v426, %v568
  %v570 = vpop.f32.mrb[0].mxu0
  %571 = vmatprep.mubr.f32.mxu0 0.0
  %572 = vmatmul.mubr.f32.gmra.mrb[0].mxu0 %v448
  %v573 = vpop.f32.mrb[0].mxu0
  %v574 = vadd.f32 %v426, %v573
  %v575 = vpop.f32.mrb[0].mxu0
  %576 = vmatprep.mubr.f32.mxu0 0.0
  %577 = vmatmul.mubr.f32.gmra.mrb[0].mxu0 %v451
  %v578 = vpop.f32.mrb[0].mxu0
  %v579 = vadd.f32 %v426, %v578
  %v580 = vpop.f32.mrb[0].mxu0
  %581 = vmatprep.mubr.f32.mxu0 0.0
  %582 = vmatmul.mubr.f32.gmra.mrb[0].mxu0 %v454
  %v583 = vpop.f32.mrb[0].mxu0
  %v584 = vadd.f32 %v426, %v583
  %v585 = vpop.f32.mrb[0].mxu0
  %586 = vmatprep.mubr.f32.mxu0 0.0
  %587 = vmatmul.mubr.f32.gmra.mrb[0].mxu0 %v457
  %v588 = vpop.f32.mrb[0].mxu0
  %v589 = vadd.f32 %v426, %v588
  %v590 = vpop.f32.mrb[0].mxu0
  %591 = vmatprep.mubr.f32.mxu0 0.0
  %592 = vmatmul.mubr.f32.gmra.mrb[0].mxu0 %v460
  %v593 = vpop.f32.mrb[0].mxu0
  %v594 = vadd.f32 %v426, %v593
  %v595 = vpop.f32.mrb[0].mxu0
  %596 = vmatprep.mubr.f32.mxu0 0.0
  %597 = vmatmul.mubr.f32.gmra.mrb[0].mxu0 %v463
  %v598 = vpop.f32.mrb[0].mxu0
  %v599 = vadd.f32 %v426, %v598
  %v600 = vpop.f32.mrb[0].mxu0
  %601 = vmatprep.mubr.f32.mxu0 0.0
  %602 = vmatmul.mubr.f32.gmra.mrb[0].mxu0 %v466
  %v603 = vpop.f32.mrb[0].mxu0
  %v604 = vadd.f32 %v426, %v603
  %v605 = vpop.f32.mrb[0].mxu0
  %606 = vmatprep.mubr.f32.mxu0 0.0
  %607 = vmatmul.mubr.f32.gmra.mrb[0].mxu0 %v469
  %v608 = vpop.f32.mrb[0].mxu0
  %v609 = vadd.f32 %v426, %v608
  %v610 = vpop.f32.mrb[0].mxu0
  %611 = vmatprep.mubr.f32.mxu0 0.0
  %612 = vmatmul.mubr.f32.gmra.mrb[0].mxu0 %v472
  %v613 = vpop.f32.mrb[0].mxu0
  %v614 = vadd.f32 %v426, %v613
  %v615 = vpop.f32.mrb[0].mxu0
  %616 = vmatprep.mubr.f32.mxu0 0.0
  %617 = vmatmul.mubr.f32.gmra.mrb[0].mxu0 %v475
  %v618 = vpop.f32.mrb[0].mxu0
  %v619 = vadd.f32 %v426, %v618
  %v620 = vpop.f32.mrb[0].mxu0
  %621 = vdwg.mxu0
  %v622 = vadd.f32 %v544, %v170
  %v623 = vadd.f32 %v549, %v175
  %v624 = vadd.f32 %v554, %v180
  %v625 = vadd.f32 %v559, %v185
  %v626 = vadd.f32 %v564, %v190
  %v627 = vadd.f32 %v569, %v195
  %v628 = vadd.f32 %v574, %v200
  %v629 = vadd.f32 %v579, %v205
  %v630 = vadd.f32 %v584, %v210
  %v631 = vadd.f32 %v589, %v215
  %v632 = vadd.f32 %v594, %v220
  %v633 = vadd.f32 %v599, %v225
  %v634 = vadd.f32 %v604, %v230
  %v635 = vadd.f32 %v609, %v235
  %v636 = vadd.f32 %v614, %v240
  %v637 = vadd.f32 %v619, %v245
  %v638 = vmax.f32 %v622, 0.0
  %v639 = vmax.f32 %v623, 0.0
  %v640 = vmax.f32 %v624, 0.0
  %v641 = vmax.f32 %v625, 0.0
  %v642 = vmax.f32 %v626, 0.0
  %v643 = vmax.f32 %v627, 0.0
  %v644 = vmax.f32 %v628, 0.0
  %v645 = vmax.f32 %v629, 0.0
  %v646 = vmax.f32 %v630, 0.0
  %v647 = vmax.f32 %v631, 0.0
  %v648 = vmax.f32 %v632, 0.0
  %v649 = vmax.f32 %v633, 0.0
  %v650 = vmax.f32 %v634, 0.0
  %v651 = vmax.f32 %v635, 0.0
  %v652 = vmax.f32 %v636, 0.0
  %v653 = vmax.f32 %v637, 0.0
  %654 = vst.msk [vmem:[%s7] sm:$0xff] %vm428, %v638
  %655 = vst.msk [vmem:[%s7 + $0x8] sm:$0xff] %vm428, %v639
  %656 = vst.msk [vmem:[%s7 + $0x10] sm:$0xff] %vm428, %v640
  %657 = vst.msk [vmem:[%s7 + $0x18] sm:$0xff] %vm428, %v641
  %658 = vst.msk [vmem:[%s7 + $0x20] sm:$0xff] %vm428, %v642
  %659 = vst.msk [vmem:[%s7 + $0x28] sm:$0xff] %vm428, %v643
  %660 = vst.msk [vmem:[%s7 + $0x30] sm:$0xff] %vm428, %v644
  %661 = vst.msk [vmem:[%s7 + $0x38] sm:$0xff] %vm428, %v645
  %662 = vst.msk [vmem:[%s7 + $0x40] sm:$0xff] %vm428, %v646
  %663 = vst.msk [vmem:[%s7 + $0x48] sm:$0xff] %vm428, %v647
  %664 = vst.msk [vmem:[%s7 + $0x50] sm:$0xff] %vm428, %v648
  %665 = vst.msk [vmem:[%s7 + $0x58] sm:$0xff] %vm428, %v649
  %666 = vst.msk [vmem:[%s7 + $0x60] sm:$0xff] %vm428, %v650
  %667 = vst.msk [vmem:[%s7 + $0x68] sm:$0xff] %vm428, %v651
  %668 = vst.msk [vmem:[%s7 + $0x70] sm:$0xff] %vm428, %v652
  %669 = vst.msk [vmem:[%s7 + $0x78] sm:$0xff] %vm428, %v653
  // Predicated region
  $region30: #{reslayer_forward.2} parent=0 // pred_check
    _
  $region31: #{reslayer_forward.2} parent=0 // pred_check_branch
    %671 = sbr.rel (0) target = $region33
  $region32: #{reslayer_forward.2} parent=0 // pred_region
    _
  $region33: #{reslayer_forward.2} parent=0 // pred_fallthru
    _
  // Predicated region
  $region34: #{reslayer_forward.2} parent=0 // pred_check
    _
  $region35: #{reslayer_forward.2} parent=0 // pred_check_branch
    %673 = sbr.rel (0) target = $region37
  $region36: #{reslayer_forward.2} parent=0 // pred_region
    _
  $region37: #{reslayer_forward.2} parent=0 // pred_fallthru
    _

</llo_original>
